<compile_context>
chip_gen: v6e
topology: v6e:2x2x1
jax: 0.10.0
libtpu: 0.0.40
codegen_flags: <defaults>
</compile_context>

<pallas_src>
import numpy as np
import jax
import jax.numpy as jnp
from jax.experimental import pallas as pl
from jax.experimental.pallas import tpu as pltpu


def build_pe(d_model: int, height: int, width: int) -> jnp.ndarray:
    """Replicates the PyTorch __init__ buffer construction exactly.

    pe[i,   y, x] = sin(y / 10000 ** (2*i / d_model))   (even i)
    pe[i+1, y, x] = cos(x / 10000 ** (2*i / d_model))
    Returns shape (1, d_model, height, width), float32.
    """
    assert d_model % 2 == 0, "d_model must be even"
    i_even = np.arange(0, d_model, 2, dtype=np.float64)          # (d_model/2,)
    div = np.power(10000.0, 2.0 * i_even / d_model)              # (d_model/2,)
    y = np.arange(height, dtype=np.float64)                      # (H,)
    x = np.arange(width, dtype=np.float64)                       # (W,)

    # even channels: sin(y / div), constant along W
    pe_even = np.sin(y[None, :, None] / div[:, None, None])      # (d/2, H, 1)
    pe_even = np.broadcast_to(pe_even, (d_model // 2, height, width))
    # odd channels: cos(x / div), constant along H
    pe_odd = np.cos(x[None, None, :] / div[:, None, None])       # (d/2, 1, W)
    pe_odd = np.broadcast_to(pe_odd, (d_model // 2, height, width))

    pe = np.zeros((d_model, height, width), dtype=np.float32)
    pe[0::2] = pe_even.astype(np.float32)
    pe[1::2] = pe_odd.astype(np.float32)
    return jnp.asarray(pe)[None]                                  # (1, d_model, H, W)


def _divisors(n: int):
    out = set()
    i = 1
    while i * i <= n:
        if n % i == 0:
            out.add(i)
            out.add(n // i)
        i += 1
    return sorted(out)


def _pick_tile(dim: int, unit: int, max_elems: int) -> int:
    """Largest divisor of `dim` that is a multiple of `unit` (or equals dim, which is
    always a legal block extent) and does not exceed max_elems; falls back to the
    smallest legal divisor so the result is always valid."""
    legal = [d for d in _divisors(dim) if (d % unit == 0) or (d == dim)]
    fitting = [d for d in legal if d <= max_elems]
    return max(fitting) if fitting else min(legal)


def _add_pe_kernel(x_ref, pe_ref, o_ref):
    # Blocks are (C_blk, S_blk); batch dim is squeezed away by the BlockSpec.
    # Add in f32 (v5e's VPU has no bf16 ALUs), store back in the output dtype.
    o_ref[...] = (x_ref[...].astype(jnp.float32)
                  + pe_ref[...].astype(jnp.float32)).astype(o_ref.dtype)


def positional_encoding_2d(x: jnp.ndarray, pe: jnp.ndarray, *,
                           block_bytes: int = 2 * 1024 * 1024,
                           donate_x: bool = False) -> jnp.ndarray:
    """x: (B, d_model, H, W); pe: (1, d_model, H, W). Returns x + pe (broadcast over B)."""
    B, C, H, W = x.shape
    assert pe.shape == (1, C, H, W)
    S = H * W

    # Free contiguous reshapes to a lane-dense last dimension.
    x2 = x.reshape(B, C, S)
    # TODO(synk): the compact (C/2,H)+(C/2,W)-table variant of pe would need in-kernel
    # sin/cos or a lane repeat/reshape relayout that Mosaic does not lower reliably;
    # pe therefore stays dense (as in the PyTorch registered buffer) but is tile-blocked
    # and its re-fetch is elided across the innermost batch axis (~1/B of x's traffic).
    pe2 = pe.reshape(C, S).astype(x.dtype)

    itemsize = np.dtype(x.dtype).itemsize
    target_elems = max(1, block_bytes // itemsize)          # elements per x block
    s_blk = _pick_tile(S, 128, target_elems)                # lane dim: mult of 128 or full S
    c_blk = _pick_tile(C, 8, max(1, target_elems // s_blk)) # sublane dim: mult of 8 or full C
    nc, ns = C // c_blk, S // s_blk

    out = pl.pallas_call(
        _add_pe_kernel,
        out_shape=jax.ShapeDtypeStruct((B, C, S), x.dtype),
        grid_spec=pltpu.PrefetchScalarGridSpec(
            num_scalar_prefetch=0,
            grid=(nc, ns, B),   # batch innermost -> pe block index constant across steps
            in_specs=[
                pl.BlockSpec((None, c_blk, s_blk), lambda ci, si, b: (b, ci, si)),
                pl.BlockSpec((c_blk, s_blk), lambda ci, si, b: (ci, si)),
            ],
            out_specs=pl.BlockSpec((None, c_blk, s_blk), lambda ci, si, b: (b, ci, si)),
        ),
        compiler_params=pltpu.CompilerParams(
            dimension_semantics=("parallel", "parallel", "parallel"),
            vmem_limit_bytes=48 * 1024 * 1024,  # headroom under v7x's 64 MiB; > v5e's 16 MiB default
        ),
        cost_estimate=pl.CostEstimate(
            flops=B * C * S,
            transcendentals=0,
            bytes_accessed=(2 * B * C * S + C * S) * itemsize,
        ),
        input_output_aliases=({0: 0} if donate_x else {}),
    )(x2, pe2)

    return out.reshape(B, C, H, W)


if __name__ == "__main__":
    B, d_model, H, W = 2, 4, 16, 16
    key = jax.random.PRNGKey(0)
    x = jax.random.normal(key, (B, d_model, H, W), dtype=jnp.float32)

    pe = build_pe(d_model, H, W)
    out = positional_encoding_2d(x, pe)
    out = jax.block_until_ready(out)

    # sanity check against plain JAX broadcast-add reference
    ref = x + pe
    assert out.shape == (B, d_model, H, W)
    np.testing.assert_allclose(np.asarray(out), np.asarray(ref), rtol=1e-6, atol=1e-6)

    print("KERNEL_OK")
</pallas_src>

<mosaic_0001>
module attributes {stable_mosaic.version = 11 : i64} {
  func.func @_add_pe_kernel(%arg0: i32, %arg1: i32, %arg2: i32, %arg3: memref<1x4x256xf32, #tpu.memory_space<vmem>>, %arg4: memref<4x256xf32, #tpu.memory_space<vmem>>, %arg5: memref<1x4x256xf32, #tpu.memory_space<vmem>>) attributes {dimension_semantics = [#tpu.dimension_semantics<parallel>, #tpu.dimension_semantics<parallel>, #tpu.dimension_semantics<parallel>], iteration_bounds = array<i64: 1, 1, 2>, scalar_prefetch = 0 : i64, scratch_operands = 0 : i64, tpu.core_type = #tpu.core_type<tc>, window_params = [{transform_indices = @transform_0, window_bounds = array<i64: 1, 4, 256>}, {transform_indices = @transform_1, window_bounds = array<i64: 4, 256>}, {transform_indices = @transform_2, window_bounds = array<i64: 1, 4, 256>}]} {
    %c0 = arith.constant 0 : index
    %c0_0 = arith.constant 0 : index
    %c0_1 = arith.constant 0 : index
    %0 = vector.load %arg3[%c0, %c0_0, %c0_1] : memref<1x4x256xf32, #tpu.memory_space<vmem>>, vector<1x4x256xf32>
    %1 = vector.shape_cast %0 : vector<1x4x256xf32> to vector<4x256xf32>
    %c0_2 = arith.constant 0 : index
    %c0_3 = arith.constant 0 : index
    %2 = vector.load %arg4[%c0_2, %c0_3] : memref<4x256xf32, #tpu.memory_space<vmem>>, vector<4x256xf32>
    %3 = arith.addf %1, %2 : vector<4x256xf32>
    %c0_4 = arith.constant 0 : index
    %c0_5 = arith.constant 0 : index
    %c0_6 = arith.constant 0 : index
    %4 = vector.load %arg5[%c0_4, %c0_5, %c0_6] : memref<1x4x256xf32, #tpu.memory_space<vmem>>, vector<1x4x256xf32>
    %5 = vector.shape_cast %4 : vector<1x4x256xf32> to vector<4x256xf32>
    %6 = vector.shape_cast %3 : vector<4x256xf32> to vector<1x4x256xf32>
    tpu.vector_store %arg5[%c0_4, %c0_5, %c0_6], %6 {strides = array<i32>} : memref<1x4x256xf32, #tpu.memory_space<vmem>>, vector<1x4x256xf32>,
    return
  }
  func.func @transform_0(%arg0: i32, %arg1: i32, %arg2: i32) -> (i32, i32, i32) {
    %c0_i32 = arith.constant 0 : i32
    return %arg2, %arg0, %arg1 : i32, i32, i32
  }
  func.func @transform_1(%arg0: i32, %arg1: i32, %arg2: i32) -> (i32, i32) {
    %c0_i32 = arith.constant 0 : i32
    return %arg0, %arg1 : i32, i32
  }
  func.func @transform_2(%arg0: i32, %arg1: i32, %arg2: i32) -> (i32, i32, i32) {
    %c0_i32 = arith.constant 0 : i32
    return %arg2, %arg0, %arg1 : i32, i32, i32
  }
}

</mosaic_0001>

<llo_original>
// kernel: tpu_custom_call.1
$region0: #{tpu_custom_call.1}
  #allocation0 [shape = 'u32[]', space=smem, size = 0x4, offset = 0x4, fixed_abs, tag = 'smem constant byte address 0x4 - core index']
  #allocation1 [shape = 'u32[144,128]{1,0:T(1,128)}', space=vmem, size = 0x12000, scoped, tag = 'internal scratch']
  %s0 = inlined_call_operand.hbm [shape: f32[2,4,256], index: 0, kind: input, shape index: {}]
  %s1 = inlined_call_operand.hbm [shape: f32[4,256], index: 1, kind: input, shape index: {}]
  %s2 = inlined_call_operand.hbm [shape: f32[2,4,256], index: 2, kind: output, shape index: {}]
  %s3 = sld [smem:[#allocation0]]
  $region49: #{tpu_custom_call.1} parent=0
    _
  %s5 = ssub.s32 1, %s3
  %s6 = scalar_select 0, %s5, %s3
  $region1: #{tpu_custom_call.1} parent=0
    #allocation2 [shape = 'u8[8192]{0}', space=vmem, size = 0x2000, scoped, tag = 'input window, operand 0']
    #allocation3 [shape = 's32[2]{0}', space=sflag, size = 0x8, scoped, tag = 'scoped memory for tpu_custom_call.1']
    #allocation4 [shape = 's32[2]{0}', space=sflag, size = 0x8, scoped, tag = 'scoped memory for tpu_custom_call.1']
    #allocation5 [shape = 'u8[4096]{0}', space=vmem, size = 0x1000, scoped, tag = 'input window, operand 1, single buffered']
    #allocation6 [shape = 's32[1]{0}', space=sflag, size = 0x4, scoped, tag = 'scoped memory for tpu_custom_call.1']
    #allocation7 [shape = 'u8[8192]{0}', space=vmem, size = 0x2000, scoped, tag = 'output window, operand 0']
    %7 = vsyncpa [#allocation3], 0
    %s8 = scalar_lea.sflag [#allocation3], 1
    %9 = vsyncpa %s8, 0
    %10 = vsyncpa [#allocation6], 0
    %11 = vsyncpa [#allocation4], 0
    %s12 = scalar_lea.sflag [#allocation4], 1
    %13 = vsyncpa %s12, 0
    loop: start=0, step=1, limit=4
    $region2: #{tpu_custom_call.1} parent=1 // loop_pre_header
      _
    $region3: #{tpu_custom_call.1} parent=1 // loop_header
      %s15 = sphi 0, %s19
      %p16 = scmp.ge.s32.totalorder %s15, 4
      %s22 = sphi 0, %s41
      %s23 = sphi 0, %s37
      %s24 = sphi 0, %s33
      %s25 = sphi 0, %s22
      %s26 = sphi 0, %s23
      %s27 = sphi 0, %s24
      %s28 = sphi 0, %s25
      %s29 = sphi 0, %s26
      %s30 = sphi 0, %s27
      %s48 = sphi 0, %s50
      %s51 = sphi 0, %s48
      %s52 = sphi 0, %s51
      %s68 = sphi 0, %s52
      %s76 = sphi 0, %s78
      %s79 = sphi 0, %s76
      %s80 = sphi 0, %s79
      %s96 = sphi 0, %s80
      %s106 = sphi 0, %s108
      %s109 = sphi 0, %s106
      %s110 = sphi 0, %s109
      %s126 = sphi 0, %s110
    $region4: #{tpu_custom_call.1} parent=1 // loop_header_branch
      %18 = sbr.rel (%p16) target = $region8
    $region5: #{tpu_custom_call.1} parent=1 // loop_body
      %s20 = ssub.s32 %s15, 1
      %s21 = ssub.s32 %s15, 2
      %s31 = sadd.s32 1, %s24
      %p32 = scmp.ge.s32.totalorder %s31, 2
      %s33 = scalar_select %p32, 0, %s31
      %s34 = sadd.s32 1, %s23
      %s35 = scalar_select %p32, %s34, %s23
      %p36 = scmp.ge.s32.totalorder %s35, 1
      %s37 = scalar_select %p36, 0, %s35
      %s38 = sadd.s32 1, %s22
      %s39 = scalar_select %p36, %s38, %s22
      %p40 = scmp.ge.s32.totalorder %s39, 1
      %s41 = scalar_select %p40, 0, %s39
      %s42 = ssub.s32 %s24, %s33
      %s43 = ssub.s32 %s22, %s41
      %s44 = sor.u32 %s42, %s43
      %s45 = ssub.s32 %s23, %s37
      %s46 = sor.u32 %s44, %s45
      %p47 = scmp.eq.s32.totalorder %s46, 0
      %s49 = sadd.s32 %s48, 1
      %s50 = scalar_select %p47, %s48, %s49
      %p53 = pneg %p47
      %p54 = scmp.eq.s32.totalorder %s15, 1
      %p55 = por %p53, %p54
      %p56 = scmp.ne.s32.totalorder %s48, %s51
      %p57 = scmp.eq.s32.totalorder %s15, 0
      %p58 = por %p56, %p57
      %p59 = scmp.ne.s32.totalorder %s48, %s51
      %p60 = scmp.eq.s32.totalorder %s20, 1
      %p61 = por %p59, %p60
      %p62 = scmp.ne.s32.totalorder %s51, %s52
      %p63 = scmp.eq.s32.totalorder %s20, 0
      %p64 = por %p62, %p63
      %p65 = scmp.ne.s32.totalorder %s51, %s52
      %p66 = scmp.eq.s32.totalorder %s21, 1
      %p67 = por %p65, %p66
      %p69 = scmp.ne.s32.totalorder %s52, %s68
      %p70 = scmp.eq.s32.totalorder %s21, 0
      %p71 = por %p69, %p70
      %s72 = ssub.s32 %s22, %s41
      %s73 = ssub.s32 %s23, %s37
      %s74 = sor.u32 %s72, %s73
      %p75 = scmp.eq.s32.totalorder %s74, 0
      %s77 = sadd.s32 %s76, 1
      %s78 = scalar_select %p75, %s76, %s77
      %p81 = pneg %p75
      %p82 = scmp.eq.s32.totalorder %s15, 1
      %p83 = por %p81, %p82
      %p84 = scmp.ne.s32.totalorder %s76, %s79
      %p85 = scmp.eq.s32.totalorder %s15, 0
      %p86 = por %p84, %p85
      %p87 = scmp.ne.s32.totalorder %s76, %s79
      %p88 = scmp.eq.s32.totalorder %s20, 1
      %p89 = por %p87, %p88
      %p90 = scmp.ne.s32.totalorder %s79, %s80
      %p91 = scmp.eq.s32.totalorder %s20, 0
      %p92 = por %p90, %p91
      %p93 = scmp.ne.s32.totalorder %s79, %s80
      %p94 = scmp.eq.s32.totalorder %s21, 1
      %p95 = por %p93, %p94
      %p97 = scmp.ne.s32.totalorder %s80, %s96
      %p98 = scmp.eq.s32.totalorder %s21, 0
      %p99 = por %p97, %p98
      %s100 = ssub.s32 %s24, %s33
      %s101 = ssub.s32 %s22, %s41
      %s102 = sor.u32 %s100, %s101
      %s103 = ssub.s32 %s23, %s37
      %s104 = sor.u32 %s102, %s103
      %p105 = scmp.eq.s32.totalorder %s104, 0
      %s107 = sadd.s32 %s106, 1
      %s108 = scalar_select %p105, %s106, %s107
      %p111 = pneg %p105
      %p112 = scmp.eq.s32.totalorder %s15, 1
      %p113 = por %p111, %p112
      %p114 = scmp.ne.s32.totalorder %s106, %s109
      %p115 = scmp.eq.s32.totalorder %s15, 0
      %p116 = por %p114, %p115
      %p117 = scmp.ne.s32.totalorder %s106, %s109
      %p118 = scmp.eq.s32.totalorder %s20, 1
      %p119 = por %p117, %p118
      %p120 = scmp.ne.s32.totalorder %s109, %s110
      %p121 = scmp.eq.s32.totalorder %s20, 0
      %p122 = por %p120, %p121
      %p123 = scmp.ne.s32.totalorder %s109, %s110
      %p124 = scmp.eq.s32.totalorder %s21, 1
      %p125 = por %p123, %p124
      %p127 = scmp.ne.s32.totalorder %s110, %s126
      %p128 = scmp.eq.s32.totalorder %s21, 0
      %p129 = por %p127, %p128
      %p130 = scmp.le.s32.totalorder 1, %s15
      %p131 = scmp.lt.s32.totalorder %s15, 3
      %p132 = pnand %p130, %p131
      %p133 = pneg %p132
      // Predicated region
      $region9: #{tpu_custom_call.1} parent=5 // pred_check
        _
      $region10: #{tpu_custom_call.1} parent=5 // pred_check_branch
        %135 = sbr.rel (%p132) target = $region12
      $region11: #{tpu_custom_call.1} parent=5 // pred_region
        %s136 = ssub.s32 %s15, 1
        // Predicated region
        $region13: #{tpu_custom_call.1} parent=11 // pred_check
          %p137 = pneg %p92
        $region14: #{tpu_custom_call.1} parent=11 // pred_check_branch
          %139 = sbr.rel (%p137) target = $region16
        $region15: #{tpu_custom_call.1} parent=11 // pred_region
          %s140 = smul.u32 2, %s26
          %s142 = ssub.s32 128, 128
          %143 = vsyncadd [#allocation6], %s142
          %s144 = smul.addr %s25, 2
          %s145 = sadd.s32 %s140, %s144
          %s146 = smul.addr %s145, 64
          %s147 = scalar_lea.hbm %s1, %s146
          %s149 = sshll.u32 [#allocation5], 4
          %s150 = int_to_ptr.vmem [resolvable:$true] %s149
          %152 = dma.hbm_to_vmem [thread:$0]  %s147, 128, %s150, [#allocation6]
        $region16: #{tpu_custom_call.1} parent=11 // pred_fallthru
          _
      $region12: #{tpu_custom_call.1} parent=5 // pred_fallthru
        _
      %p153 = scmp.lt.s32.totalorder %s15, 2
      // Predicated region
      $region17: #{tpu_custom_call.1} parent=5 // pred_check
        %p154 = pneg %p153
      $region18: #{tpu_custom_call.1} parent=5 // pred_check_branch
        %156 = sbr.rel (%p154) target = $region20
      $region19: #{tpu_custom_call.1} parent=5 // pred_region
        // Predicated region
        $region21: #{tpu_custom_call.1} parent=19 // pred_check
          %p157 = pneg %p58
        $region22: #{tpu_custom_call.1} parent=19 // pred_check_branch
          %159 = sbr.rel (%p157) target = $region24
        $region23: #{tpu_custom_call.1} parent=19 // pred_region
          %s160 = sand.u32 %s48, 1
          %s161 = scalar_lea.sflag [#allocation3], %s160
          %s162 = sand.u32 %s48, 1
          %s163 = smul.addr %s162, 8
          %s164 = scalar_lea.vmem [#allocation2], %s163
          %s165 = smul.u32 2, %s23
          %s167 = ssub.s32 128, 128
          %168 = vsyncadd %s161, %s167
          %s169 = smul.addr %s22, 2
          %s170 = sadd.s32 %s165, %s169
          %s171 = smul.addr %s24, 2
          %s172 = sadd.s32 %s170, %s171
          %s173 = smul.addr %s172, 64
          %s174 = scalar_lea.hbm %s0, %s173
          %s176 = sshll.u32 %s164, 4
          %s177 = int_to_ptr.vmem [resolvable:$true] %s176
          %179 = dma.hbm_to_vmem [thread:$0]  %s174, 128, %s177, %s161
        $region24: #{tpu_custom_call.1} parent=19 // pred_fallthru
          _
      $region20: #{tpu_custom_call.1} parent=5 // pred_fallthru
        _
      %p180 = scmp.le.s32.totalorder 1, %s15
      %p181 = scmp.lt.s32.totalorder %s15, 3
      %p182 = pnand %p180, %p181
      %p183 = pneg %p182
      // Predicated region
      $region25: #{tpu_custom_call.1} parent=5 // pred_check
        _
      $region26: #{tpu_custom_call.1} parent=5 // pred_check_branch
        %185 = sbr.rel (%p182) target = $region28
      $region27: #{tpu_custom_call.1} parent=5 // pred_region
        %s186 = ssub.s32 %s15, 1
        %s187 = sand.u32 %s51, 1
        %s188 = scalar_lea.sflag [#allocation3], %s187
        %s189 = sand.u32 %s51, 1
        %s190 = smul.addr %s189, 8
        %s191 = scalar_lea.vmem [#allocation2], %s190
        // Predicated region
        $region29: #{tpu_custom_call.1} parent=27 // pred_check
          %p192 = pneg %p64
        $region30: #{tpu_custom_call.1} parent=27 // pred_check_branch
          %194 = sbr.rel (%p192) target = $region32
        $region31: #{tpu_custom_call.1} parent=27 // pred_region
          %195 = dma.done %s188, 128
        $region32: #{tpu_custom_call.1} parent=27 // pred_fallthru
          _
        // Predicated region
        $region33: #{tpu_custom_call.1} parent=27 // pred_check
          %p196 = pneg %p92
        $region34: #{tpu_custom_call.1} parent=27 // pred_check_branch
          %198 = sbr.rel (%p196) target = $region36
        $region35: #{tpu_custom_call.1} parent=27 // pred_region
          %199 = dma.done [#allocation6], 128
        $region36: #{tpu_custom_call.1} parent=27 // pred_fallthru
          _
        %s200 = sand.u32 %s51, 1
        %s201 = scalar_lea.sflag [#allocation3], %s200
        %s202 = sand.u32 %s51, 1
        %s203 = smul.addr %s202, 8
        %s204 = scalar_lea.vmem [#allocation2], %s203
        %p205 = pneg %p64
        %p206 = pneg %p61
        %p207 = pneg %p92
        %p208 = pneg %p89
        %p209 = pneg %p122
        %p210 = pneg %p119
        %s211 = sand.u32 %s109, 1
        %s212 = scalar_lea.sflag [#allocation4], %s211
        %s213 = sand.u32 %s109, 1
        %s214 = smul.addr %s213, 8
        %s215 = scalar_lea.vmem [#allocation7], %s214
        %s216 = smul.u32 2, %s26
        %s217 = smul.u32 2, %s26
        %s218 = smul.u32 2, %s26
        %v219 = vld [vmem:[%s191] sm:$0xff]
        %v220 = vld [vmem:[#allocation5] sm:$0xff]
        %v221 = vadd.f32 %v219, %v220
        %222 = vst [vmem:[%s215] sm:$0xff] %v221
        %s223 = sand.u32 %s109, 1
        %s224 = scalar_lea.sflag [#allocation4], %s223
        %s225 = sand.u32 %s109, 1
        %s226 = smul.addr %s225, 8
        %s227 = scalar_lea.vmem [#allocation7], %s226
        // Predicated region
        $region37: #{tpu_custom_call.1} parent=27 // pred_check
          %p228 = pneg %p119
        $region38: #{tpu_custom_call.1} parent=27 // pred_check_branch
          %230 = sbr.rel (%p228) target = $region40
        $region39: #{tpu_custom_call.1} parent=27 // pred_region
          %s231 = smul.u32 2, %s26
          %s233 = ssub.s32 128, 128
          %234 = vsyncadd %s224, %s233
          %s235 = smul.addr %s25, 2
          %s236 = sadd.s32 %s231, %s235
          %s237 = smul.addr %s27, 2
          %s238 = sadd.s32 %s236, %s237
          %s239 = smul.addr %s238, 64
          %s240 = scalar_lea.hbm %s2, %s239
          %s242 = sshll.u32 %s227, 4
          %s243 = int_to_ptr.vmem [resolvable:$true] %s242
          %245 = dma.vmem_to_hbm [thread:$0]  %s243, 128, %s240, %s224
        $region40: #{tpu_custom_call.1} parent=27 // pred_fallthru
          _
      $region28: #{tpu_custom_call.1} parent=5 // pred_fallthru
        _
      %p246 = scmp.le.s32.totalorder 2, %s15
      // Predicated region
      $region41: #{tpu_custom_call.1} parent=5 // pred_check
        %p247 = pneg %p246
      $region42: #{tpu_custom_call.1} parent=5 // pred_check_branch
        %249 = sbr.rel (%p247) target = $region44
      $region43: #{tpu_custom_call.1} parent=5 // pred_region
        %s250 = ssub.s32 %s15, 2
        // Predicated region
        $region45: #{tpu_custom_call.1} parent=43 // pred_check
          %p251 = pneg %p125
        $region46: #{tpu_custom_call.1} parent=43 // pred_check_branch
          %253 = sbr.rel (%p251) target = $region48
        $region47: #{tpu_custom_call.1} parent=43 // pred_region
          %s254 = sand.u32 %s110, 1
          %s255 = scalar_lea.sflag [#allocation4], %s254
          %s256 = sand.u32 %s110, 1
          %s257 = smul.addr %s256, 8
          %s258 = scalar_lea.vmem [#allocation7], %s257
          %259 = dma.done %s255, 128
        $region48: #{tpu_custom_call.1} parent=43 // pred_fallthru
          _
      $region44: #{tpu_custom_call.1} parent=5 // pred_fallthru
        _
    $region6: #{tpu_custom_call.1} parent=1 // loop_footer
      %s19 = sadd.s32 1, %s15
    $region7: #{tpu_custom_call.1} parent=1 // loop_footer_branch
      %14 = sbr.rel target = $region3
    $region8: #{tpu_custom_call.1} parent=1 // loop_exit
      _
    %260 = vsyncpa [#allocation3], 1
    %s261 = scalar_lea.sflag [#allocation3], 1
    %262 = vsyncpa %s261, 1
    %263 = vsyncpa [#allocation6], 1
    %264 = vsyncpa [#allocation4], 1
    %s265 = scalar_lea.sflag [#allocation4], 1
    %266 = vsyncpa %s265, 1

</llo_original>
